<compile_context>
chip_gen: v7x
topology: tpu7x:2x2x1
jax: 0.10.0
libtpu: 0.0.40
codegen_flags: <defaults>
</compile_context>

<pallas_src>
from typing import NamedTuple, Optional

import jax
import jax.numpy as jnp
from jax.experimental import pallas as pl
from jax.experimental.pallas import tpu as pltpu

_LANE = 128


def _round_up(a: int, b: int) -> int:
    return ((a + b - 1) // b) * b


def _sublane_packing(dtype) -> int:
    # Native sublane packing: f32 -> 8, bf16 -> 16, int8/fp8 -> 32.
    return max(8, 32 // jnp.dtype(dtype).itemsize)


class PreparedWeight(NamedTuple):
    """Classifier weight prepared once at init: cast, padded, stored as (Dp, Vp)."""
    w_t: jax.Array   # (Dp, Vp) in compute dtype
    dim: int         # original D
    vocab: int       # original V


def prepare_lm_head_weight(weight, *, compute_dtype=jnp.bfloat16) -> PreparedWeight:
    """Pad / cast / transpose the (V, D) classifier weight ONCE (init-time)."""
    V, D = weight.shape
    Dp = _round_up(D, _LANE)
    # Pad V so that any tn in {128, ..., 2048} used at call time divides Vp.
    Vp = _round_up(V, 2048) if V > 2048 else _round_up(V, 256)
    w = weight.astype(compute_dtype)
    if (Vp, Dp) != (V, D):
        w = jnp.pad(w, ((0, Vp - V), (0, Dp - D)))
    return PreparedWeight(w_t=jnp.transpose(w), dim=D, vocab=V)


# ----------------------------- kernels --------------------------------------


def _lm_head_kernel_single_k(x_ref, w_ref, o_ref):
    # x_ref: (tm, Dp), w_ref: (Dp, tn) -> canonical MXU matmul, f32 accumulate.
    o_ref[...] = jnp.dot(
        x_ref[...], w_ref[...], preferred_element_type=jnp.float32
    ).astype(o_ref.dtype)


def _lm_head_kernel_acc(x_ref, w_ref, o_ref, acc_ref):
    # Grid = (M/tm, V/tn, D/tk); reduction axis (k) last.
    @pl.when(pl.program_id(2) == 0)
    def _():
        acc_ref[...] = jnp.zeros_like(acc_ref)

    acc_ref[...] += jnp.dot(
        x_ref[...], w_ref[...], preferred_element_type=jnp.float32
    )

    @pl.when(pl.program_id(2) == pl.num_programs(2) - 1)
    def _():
        o_ref[...] = acc_ref[...].astype(o_ref.dtype)


# --------------------------- tiling heuristics -------------------------------


def _generation_defaults(compute_itemsize: int):
    """Pick (tm, tn, single_k_cutoff, vmem_limit) per TPU generation."""
    vmem_cap = 128 * 1024 * 1024
    try:
        info = pltpu.get_tpu_info()
        cap = getattr(info, "vmem_capacity_bytes", None)
        if cap:
            vmem_cap = int(cap)
    except Exception:
        pass
    if vmem_cap >= 96 * 1024 * 1024:
        # v5e / v6e: 128 MiB VMEM -> go big; stay near the MXU roofline.
        vmem_limit = 100 * 1024 * 1024
        if compute_itemsize <= 2:
            tm, tn, k_cutoff = 2048, 2048, 4096
        else:
            tm, tn, k_cutoff = 1024, 1024, 2048
    else:
        # v7x: 64 MiB VMEM per TensorCore -> cap the working set.
        vmem_limit = 52 * 1024 * 1024
        if compute_itemsize <= 2:
            tm, tn, k_cutoff = 2048, 1024, 2048
        else:
            tm, tn, k_cutoff = 1024, 1024, 2048
    return tm, tn, k_cutoff, vmem_limit


def _vmem_bytes(tm, tn, tk, in_item, out_item, use_acc):
    # Double-buffered inputs + output, plus f32 accumulator if present.
    b = 2 * (tm * tk + tk * tn) * in_item + 2 * tm * tn * out_item
    if use_acc:
        b += tm * tn * 4
    return b


# ------------------------------ wrapper --------------------------------------


def gpt_lm_head(x, weight, *, compute_dtype=jnp.bfloat16, out_dtype=None,
                tm: Optional[int] = None, tn: Optional[int] = None,
                tk: Optional[int] = None, vmem_limit_bytes: Optional[int] = None):
    """GPTLMHead forward: logits = x @ W^T (bias-free col_nn.Classifier).

    x: (B, S, D).  weight: either a raw (V, D) array (padded/cast/transposed
    per call - fine for tests, avoid in the hot path) or a PreparedWeight from
    prepare_lm_head_weight() (init-time prep, recommended).

    Defaults stream bf16 operands with f32 MXU accumulation, and out_dtype
    defaults to the compute dtype (i.e. bf16 logits).  Pass
    compute_dtype=jnp.float32 / out_dtype=jnp.float32 for an exact f32 path.
    """
    if isinstance(weight, PreparedWeight):
        prep = weight
    else:
        prep = prepare_lm_head_weight(
            weight, compute_dtype=(compute_dtype if compute_dtype is not None else x.dtype))
    compute_dtype = prep.w_t.dtype

    B, S, D = x.shape
    assert D == prep.dim, (D, prep.dim)
    V = prep.vocab
    Dp, Vp = prep.w_t.shape
    M = B * S

    if out_dtype is None:
        out_dtype = compute_dtype
    in_item = jnp.dtype(compute_dtype).itemsize
    out_item = jnp.dtype(out_dtype).itemsize

    tm_d, tn_d, k_cutoff, vmem_d = _generation_defaults(in_item)
    if tm is None:
        tm = tm_d
    if tn is None:
        tn = tn_d
    if vmem_limit_bytes is None:
        vmem_limit_bytes = vmem_d

    # ---- tile selection -----------------------------------------------------
    packing = _sublane_packing(compute_dtype)
    tm = _round_up(min(tm, _round_up(M, packing)), packing)
    tn = min(tn, Vp)
    if Vp % tn != 0:           # defensive; prep padding makes this divisible
        tn = Vp

    if tk is None:
        if Dp <= k_cutoff:
            tk = Dp
        else:
            tk = max((c for c in (2048, 1024, 512, 256, 128) if Dp % c == 0),
                     default=Dp)
    tk = min(tk, Dp)
    if Dp % tk != 0:
        tk = Dp

    # Shrink (tk -> tm -> tn) until the double-buffered working set fits VMEM.
    def _fits(tm_, tn_, tk_):
        return _vmem_bytes(tm_, tn_, tk_, in_item, out_item, tk_ != Dp) <= vmem_limit_bytes

    while not _fits(tm, tn, tk):
        if tk >= 256 and Dp % (tk // 2) == 0:
            tk //= 2
        elif tm > packing:
            tm = max(packing, tm // 2)
        elif tn >= 256 and Vp % (tn // 2) == 0:
            tn //= 2
        else:
            break
    tm = _round_up(tm, packing)
    Mp = _round_up(M, tm)

    # Megacore / v7x: if the M axis collapses to one block (decode-shaped call),
    # split the vocab axis so the grid still shards across two TensorCores.
    if Mp // tm == 1 and Vp // tn == 1 and Vp >= 256 and Vp % 256 == 0:
        tn = Vp // 2

    gm, gn, gk = Mp // tm, Vp // tn, Dp // tk

    # ---- per-call activation prep (small compared to the weight) -------------
    x2d = x.astype(compute_dtype).reshape(M, D)
    if (Mp, Dp) != (M, D):
        x2d = jnp.pad(x2d, ((0, Mp - M), (0, Dp - D)))  # zero pad -> 0 contribution

    # Re-streaming-aware HBM traffic estimate (padded dims, consistent w/ flops).
    cost = pl.CostEstimate(
        flops=2 * Mp * Dp * Vp,
        transcendentals=0,
        bytes_accessed=int(Mp * Dp * in_item * gn
                           + Dp * Vp * in_item * gm
                           + Mp * Vp * out_item),
    )

    if gk == 1:
        # Single reduction step: no accumulator scratch, no pl.when branches.
        out = pl.pallas_call(
            _lm_head_kernel_single_k,
            out_shape=jax.ShapeDtypeStruct((Mp, Vp), out_dtype),
            grid_spec=pltpu.PrefetchScalarGridSpec(
                num_scalar_prefetch=0,
                grid=(gm, gn),
                in_specs=[
                    pl.BlockSpec((tm, Dp), lambda i, j: (i, 0)),
                    pl.BlockSpec((Dp, tn), lambda i, j: (0, j)),
                ],
                out_specs=pl.BlockSpec((tm, tn), lambda i, j: (i, j)),
            ),
            compiler_params=pltpu.CompilerParams(
                dimension_semantics=("parallel", "parallel"),
                vmem_limit_bytes=vmem_limit_bytes,
            ),
            cost_estimate=cost,
        )(x2d, prep.w_t)
    else:
        out = pl.pallas_call(
            _lm_head_kernel_acc,
            out_shape=jax.ShapeDtypeStruct((Mp, Vp), out_dtype),
            grid_spec=pltpu.PrefetchScalarGridSpec(
                num_scalar_prefetch=0,
                grid=(gm, gn, gk),
                in_specs=[
                    pl.BlockSpec((tm, tk), lambda i, j, k: (i, k)),
                    pl.BlockSpec((tk, tn), lambda i, j, k: (k, j)),
                ],
                out_specs=pl.BlockSpec((tm, tn), lambda i, j, k: (i, j)),
                scratch_shapes=[pltpu.VMEM((tm, tn), jnp.float32)],
            ),
            compiler_params=pltpu.CompilerParams(
                dimension_semantics=("parallel", "parallel", "arbitrary"),
                vmem_limit_bytes=vmem_limit_bytes,
            ),
            cost_estimate=cost,
        )(x2d, prep.w_t)

    if (Mp, Vp) != (M, V):
        out = out[:M, :V]
    return out.reshape(B, S, V)


# TODO(synk): GPTEmbedding (gather), GPTBlock (attention / MLP / LayerNorm) and
# dropout of the full PipelineGPT are not kernelized here; this covers the
# GPTLMHead classifier projection that the performance review targeted.


if __name__ == "__main__":
    # Small shapes consistent with the module: dim=128, vocab_size=256,
    # batch=2, seq=8.
    B, S, D, V = 2, 8, 128, 256

    key = jax.random.PRNGKey(0)
    kx, kw, kx2, kw2 = jax.random.split(key, 4)
    x = jax.random.normal(kx, (B, S, D), dtype=jnp.float32)
    weight = jax.random.normal(kw, (V, D), dtype=jnp.float32) * 0.02

    ref = jnp.einsum("bsd,vd->bsv", x, weight)

    # 1) Default path: bf16 streaming, f32 accumulation, bf16 logits.
    logits = gpt_lm_head(x, weight)
    jax.block_until_ready(logits)
    assert logits.shape == (B, S, V)
    assert logits.dtype == jnp.bfloat16
    assert jnp.allclose(logits.astype(jnp.float32), ref, atol=5e-2, rtol=5e-2)

    # 2) Exact f32 path (tight tolerance).
    logits_f32 = gpt_lm_head(x, weight, compute_dtype=jnp.float32,
                             out_dtype=jnp.float32)
    jax.block_until_ready(logits_f32)
    assert jnp.allclose(logits_f32, ref, atol=1e-4, rtol=1e-4)

    # 3) Init-time prepared weight + ragged shapes (non-128-multiple vocab,
    #    non-8-multiple tokens): exercises pad-and-slice and the decode-shaped
    #    vocab split.  Weight prep happens once, reused across two calls.
    x_r = jax.random.normal(kx2, (1, 7, D), dtype=jnp.float32)
    w_r = jax.random.normal(kw2, (250, D), dtype=jnp.float32) * 0.02
    prep_r = prepare_lm_head_weight(w_r)           # bf16, (Dp, Vp) once at init
    ref_r = jnp.einsum("bsd,vd->bsv", x_r, w_r)
    logits_r = gpt_lm_head(x_r, prep_r)
    logits_r2 = gpt_lm_head(x_r, prep_r)           # reuse: no per-call weight pad
    jax.block_until_ready((logits_r, logits_r2))
    assert logits_r.shape == (1, 7, 250)
    assert jnp.allclose(logits_r.astype(jnp.float32), ref_r, atol=5e-2, rtol=5e-2)
    assert jnp.allclose(logits_r2.astype(jnp.float32), ref_r, atol=5e-2, rtol=5e-2)

    print("KERNEL_OK")
</pallas_src>

<mosaic_0001>
module attributes {stable_mosaic.version = 11 : i64} {
  func.func @_lm_head_kernel_single_k(%arg0: i32, %arg1: i32, %arg2: memref<16x128xbf16, #tpu.memory_space<vmem>>, %arg3: memref<128x128xbf16, #tpu.memory_space<vmem>>, %arg4: memref<16x128xbf16, #tpu.memory_space<vmem>>) attributes {dimension_semantics = [#tpu.dimension_semantics<parallel>, #tpu.dimension_semantics<parallel>], iteration_bounds = array<i64: 1, 2>, scalar_prefetch = 0 : i64, scratch_operands = 0 : i64, tpu.core_type = #tpu.core_type<tc>, window_params = [{transform_indices = @transform_0, window_bounds = array<i64: 16, 128>}, {transform_indices = @transform_1, window_bounds = array<i64: 128, 128>}, {transform_indices = @transform_2, window_bounds = array<i64: 16, 128>}]} {
    %c0 = arith.constant 0 : index
    %c0_0 = arith.constant 0 : index
    %0 = vector.load %arg2[%c0, %c0_0] : memref<16x128xbf16, #tpu.memory_space<vmem>>, vector<16x128xbf16>
    %c0_1 = arith.constant 0 : index
    %c0_2 = arith.constant 0 : index
    %1 = vector.load %arg3[%c0_1, %c0_2] : memref<128x128xbf16, #tpu.memory_space<vmem>>, vector<128x128xbf16>
    %cst = arith.constant dense<0.000000e+00> : vector<16x128xf32>
    %2 = tpu.matmul %0, %1, %cst {dimension_numbers = #tpu.dot_dimension_numbers<[1], [0], [0], [1], [0, 0, 1, 1], [], []>} : vector<16x128xbf16>, vector<128x128xbf16>, vector<16x128xf32> -> vector<16x128xf32>
    %3 = arith.truncf %2 : vector<16x128xf32> to vector<16x128xbf16>
    %c0_3 = arith.constant 0 : index
    %c0_4 = arith.constant 0 : index
    %4 = vector.load %arg4[%c0_3, %c0_4] : memref<16x128xbf16, #tpu.memory_space<vmem>>, vector<16x128xbf16>
    tpu.vector_store %arg4[%c0_3, %c0_4], %3 {strides = array<i32>} : memref<16x128xbf16, #tpu.memory_space<vmem>>, vector<16x128xbf16>,
    return
  }
  func.func @transform_0(%arg0: i32, %arg1: i32) -> (i32, i32) {
    %c0_i32 = arith.constant 0 : i32
    %c0_i32_0 = arith.constant 0 : i32
    return %arg0, %c0_i32 : i32, i32
  }
  func.func @transform_1(%arg0: i32, %arg1: i32) -> (i32, i32) {
    %c0_i32 = arith.constant 0 : i32
    %c0_i32_0 = arith.constant 0 : i32
    return %c0_i32, %arg1 : i32, i32
  }
  func.func @transform_2(%arg0: i32, %arg1: i32) -> (i32, i32) {
    %c0_i32 = arith.constant 0 : i32
    return %arg0, %arg1 : i32, i32
  }
}

</mosaic_0001>

<llo_original>
// kernel: tpu_custom_call.1
$region0: #{tpu_custom_call.1}
  #allocation0 [shape = 'u32[]', space=smem, size = 0x4, offset = 0x4, fixed_abs, tag = 'smem constant byte address 0x4 - core index']
  #allocation1 [shape = 'u32[144,128]{1,0:T(1,128)}', space=vmem, size = 0x12000, scoped, tag = 'internal scratch']
  %s0 = inlined_call_operand.hbm [shape: bf16[16,128], index: 0, kind: input, shape index: {}]
  %s1 = inlined_call_operand.hbm [shape: bf16[128,256], index: 1, kind: input, shape index: {}]
  %s2 = inlined_call_operand.hbm [shape: bf16[16,256], index: 2, kind: output, shape index: {}]
  %s3 = sld [smem:[#allocation0]]
  $region49: #{tpu_custom_call.1} parent=0
    _
  %s5 = ssub.s32 1, %s3
  %s6 = scalar_select 0, %s5, %s3
  $region1: #{tpu_custom_call.1} parent=0
    #allocation2 [shape = 'u8[4096]{0}', space=vmem, size = 0x1000, scoped, tag = 'input window, operand 0, single buffered']
    #allocation3 [shape = 's32[2]{0}', space=sflag, size = 0x8, scoped, tag = 'scoped memory for tpu_custom_call.1']
    #allocation4 [shape = 's32[2]{0}', space=sflag, size = 0x8, scoped, tag = 'scoped memory for tpu_custom_call.1']
    #allocation5 [shape = 'u8[65536]{0}', space=vmem, size = 0x10000, scoped, tag = 'input window, operand 1']
    #allocation6 [shape = 's32[2]{0}', space=sflag, size = 0x8, scoped, tag = 'scoped memory for tpu_custom_call.1']
    #allocation7 [shape = 'u8[8192]{0}', space=vmem, size = 0x2000, scoped, tag = 'output window, operand 0']
    %7 = vsyncpa [#allocation3], 0
    %8 = vsyncpa [#allocation6], 0
    %s9 = scalar_lea.sflag [#allocation6], 1
    %10 = vsyncpa %s9, 0
    %11 = vsyncpa [#allocation4], 0
    %s12 = scalar_lea.sflag [#allocation4], 1
    %13 = vsyncpa %s12, 0
    loop: start=0, step=1, limit=4
    $region2: #{tpu_custom_call.1} parent=1 // loop_pre_header
      _
    $region3: #{tpu_custom_call.1} parent=1 // loop_header
      %s15 = sphi 0, %s19
      %p16 = scmp.ge.s32.totalorder %s15, 4
      %s22 = sphi 0, %s34
      %s23 = sphi 0, %s30
      %s24 = sphi 0, %s22
      %s25 = sphi 0, %s23
      %s26 = sphi 0, %s24
      %s27 = sphi 0, %s25
      %s37 = sphi 0, %s39
      %s40 = sphi 0, %s37
      %s41 = sphi 0, %s40
      %s57 = sphi 0, %s41
      %s63 = sphi 0, %s65
      %s66 = sphi 0, %s63
      %s67 = sphi 0, %s66
      %s83 = sphi 0, %s67
      %s91 = sphi 0, %s93
      %s94 = sphi 0, %s91
      %s95 = sphi 0, %s94
      %s111 = sphi 0, %s95
    $region4: #{tpu_custom_call.1} parent=1 // loop_header_branch
      %18 = sbr.rel (%p16) target = $region8
    $region5: #{tpu_custom_call.1} parent=1 // loop_body
      %s20 = ssub.s32 %s15, 1
      %s21 = ssub.s32 %s15, 2
      %s28 = sadd.s32 1, %s23
      %p29 = scmp.ge.s32.totalorder %s28, 2
      %s30 = scalar_select %p29, 0, %s28
      %s31 = sadd.s32 1, %s22
      %s32 = scalar_select %p29, %s31, %s22
      %p33 = scmp.ge.s32.totalorder %s32, 1
      %s34 = scalar_select %p33, 0, %s32
      %s35 = ssub.s32 %s22, %s34
      %p36 = scmp.eq.s32.totalorder %s35, 0
      %s38 = sadd.s32 %s37, 1
      %s39 = scalar_select %p36, %s37, %s38
      %p42 = pneg %p36
      %p43 = scmp.eq.s32.totalorder %s15, 1
      %p44 = por %p42, %p43
      %p45 = scmp.ne.s32.totalorder %s37, %s40
      %p46 = scmp.eq.s32.totalorder %s15, 0
      %p47 = por %p45, %p46
      %p48 = scmp.ne.s32.totalorder %s37, %s40
      %p49 = scmp.eq.s32.totalorder %s20, 1
      %p50 = por %p48, %p49
      %p51 = scmp.ne.s32.totalorder %s40, %s41
      %p52 = scmp.eq.s32.totalorder %s20, 0
      %p53 = por %p51, %p52
      %p54 = scmp.ne.s32.totalorder %s40, %s41
      %p55 = scmp.eq.s32.totalorder %s21, 1
      %p56 = por %p54, %p55
      %p58 = scmp.ne.s32.totalorder %s41, %s57
      %p59 = scmp.eq.s32.totalorder %s21, 0
      %p60 = por %p58, %p59
      %s61 = ssub.s32 %s23, %s30
      %p62 = scmp.eq.s32.totalorder %s61, 0
      %s64 = sadd.s32 %s63, 1
      %s65 = scalar_select %p62, %s63, %s64
      %p68 = pneg %p62
      %p69 = scmp.eq.s32.totalorder %s15, 1
      %p70 = por %p68, %p69
      %p71 = scmp.ne.s32.totalorder %s63, %s66
      %p72 = scmp.eq.s32.totalorder %s15, 0
      %p73 = por %p71, %p72
      %p74 = scmp.ne.s32.totalorder %s63, %s66
      %p75 = scmp.eq.s32.totalorder %s20, 1
      %p76 = por %p74, %p75
      %p77 = scmp.ne.s32.totalorder %s66, %s67
      %p78 = scmp.eq.s32.totalorder %s20, 0
      %p79 = por %p77, %p78
      %p80 = scmp.ne.s32.totalorder %s66, %s67
      %p81 = scmp.eq.s32.totalorder %s21, 1
      %p82 = por %p80, %p81
      %p84 = scmp.ne.s32.totalorder %s67, %s83
      %p85 = scmp.eq.s32.totalorder %s21, 0
      %p86 = por %p84, %p85
      %s87 = ssub.s32 %s22, %s34
      %s88 = ssub.s32 %s23, %s30
      %s89 = sor.u32 %s87, %s88
      %p90 = scmp.eq.s32.totalorder %s89, 0
      %s92 = sadd.s32 %s91, 1
      %s93 = scalar_select %p90, %s91, %s92
      %p96 = pneg %p90
      %p97 = scmp.eq.s32.totalorder %s15, 1
      %p98 = por %p96, %p97
      %p99 = scmp.ne.s32.totalorder %s91, %s94
      %p100 = scmp.eq.s32.totalorder %s15, 0
      %p101 = por %p99, %p100
      %p102 = scmp.ne.s32.totalorder %s91, %s94
      %p103 = scmp.eq.s32.totalorder %s20, 1
      %p104 = por %p102, %p103
      %p105 = scmp.ne.s32.totalorder %s94, %s95
      %p106 = scmp.eq.s32.totalorder %s20, 0
      %p107 = por %p105, %p106
      %p108 = scmp.ne.s32.totalorder %s94, %s95
      %p109 = scmp.eq.s32.totalorder %s21, 1
      %p110 = por %p108, %p109
      %p112 = scmp.ne.s32.totalorder %s95, %s111
      %p113 = scmp.eq.s32.totalorder %s21, 0
      %p114 = por %p112, %p113
      %p115 = scmp.le.s32.totalorder 1, %s15
      %p116 = scmp.lt.s32.totalorder %s15, 3
      %p117 = pnand %p115, %p116
      %p118 = pneg %p117
      // Predicated region
      $region9: #{tpu_custom_call.1} parent=5 // pred_check
        _
      $region10: #{tpu_custom_call.1} parent=5 // pred_check_branch
        %120 = sbr.rel (%p117) target = $region12
      $region11: #{tpu_custom_call.1} parent=5 // pred_region
        %s121 = ssub.s32 %s15, 1
        // Predicated region
        $region13: #{tpu_custom_call.1} parent=11 // pred_check
          %p122 = pneg %p53
        $region14: #{tpu_custom_call.1} parent=11 // pred_check_branch
          %124 = sbr.rel (%p122) target = $region16
        $region15: #{tpu_custom_call.1} parent=11 // pred_region
          %s125 = smul.u32 2, %s24
          %s127 = ssub.s32 128, 128
          %128 = vsyncadd [#allocation3], %s127
          %s129 = smul.addr %s125, 64
          %s130 = scalar_lea.hbm %s0, %s129
          %s131 = sshll.u32 [#allocation2], 4
          %s132 = int_to_ptr.vmem [resolvable:$true] %s131
          %137 = dma.hbm_to_vmem [thread:$0]  %s130, 128, %s132, [#allocation3], 64, 64, 4
        $region16: #{tpu_custom_call.1} parent=11 // pred_fallthru
          _
      $region12: #{tpu_custom_call.1} parent=5 // pred_fallthru
        _
      %p138 = scmp.lt.s32.totalorder %s15, 2
      // Predicated region
      $region17: #{tpu_custom_call.1} parent=5 // pred_check
        %p139 = pneg %p138
      $region18: #{tpu_custom_call.1} parent=5 // pred_check_branch
        %141 = sbr.rel (%p139) target = $region20
      $region19: #{tpu_custom_call.1} parent=5 // pred_region
        // Predicated region
        $region21: #{tpu_custom_call.1} parent=19 // pred_check
          %p142 = pneg %p73
        $region22: #{tpu_custom_call.1} parent=19 // pred_check_branch
          %144 = sbr.rel (%p142) target = $region24
        $region23: #{tpu_custom_call.1} parent=19 // pred_region
          %s145 = sand.u32 %s63, 1
          %s146 = scalar_lea.sflag [#allocation6], %s145
          %s147 = sand.u32 %s63, 1
          %s148 = smul.addr %s147, 64
          %s149 = scalar_lea.vmem [#allocation5], %s148
          %s151 = ssub.s32 1024, 1024
          %152 = vsyncadd %s146, %s151
          %s153 = smul.addr %s23, 64
          %s154 = scalar_lea.hbm %s1, %s153
          %s155 = sshll.u32 %s149, 4
          %s156 = int_to_ptr.vmem [resolvable:$true] %s155
          %161 = dma.hbm_to_vmem [thread:$0]  %s154, 1024, %s156, %s146, 128, 64, 4
        $region24: #{tpu_custom_call.1} parent=19 // pred_fallthru
          _
      $region20: #{tpu_custom_call.1} parent=5 // pred_fallthru
        _
      %p162 = scmp.le.s32.totalorder 1, %s15
      %p163 = scmp.lt.s32.totalorder %s15, 3
      %p164 = pnand %p162, %p163
      %p165 = pneg %p164
      // Predicated region
      $region25: #{tpu_custom_call.1} parent=5 // pred_check
        _
      $region26: #{tpu_custom_call.1} parent=5 // pred_check_branch
        %167 = sbr.rel (%p164) target = $region28
      $region27: #{tpu_custom_call.1} parent=5 // pred_region
        %s168 = ssub.s32 %s15, 1
        // Predicated region
        $region29: #{tpu_custom_call.1} parent=27 // pred_check
          %p169 = pneg %p53
        $region30: #{tpu_custom_call.1} parent=27 // pred_check_branch
          %171 = sbr.rel (%p169) target = $region32
        $region31: #{tpu_custom_call.1} parent=27 // pred_region
          %172 = dma.done [#allocation3], 128
        $region32: #{tpu_custom_call.1} parent=27 // pred_fallthru
          _
        %s173 = sand.u32 %s66, 1
        %s174 = scalar_lea.sflag [#allocation6], %s173
        %s175 = sand.u32 %s66, 1
        %s176 = smul.addr %s175, 64
        %s177 = scalar_lea.vmem [#allocation5], %s176
        // Predicated region
        $region33: #{tpu_custom_call.1} parent=27 // pred_check
          %p178 = pneg %p79
        $region34: #{tpu_custom_call.1} parent=27 // pred_check_branch
          %180 = sbr.rel (%p178) target = $region36
        $region35: #{tpu_custom_call.1} parent=27 // pred_region
          %181 = dma.done %s174, 1024
        $region36: #{tpu_custom_call.1} parent=27 // pred_fallthru
          _
        %p182 = pneg %p53
        %p183 = pneg %p50
        %s184 = sand.u32 %s66, 1
        %s185 = scalar_lea.sflag [#allocation6], %s184
        %s186 = sand.u32 %s66, 1
        %s187 = smul.addr %s186, 64
        %s188 = scalar_lea.vmem [#allocation5], %s187
        %p189 = pneg %p79
        %p190 = pneg %p76
        %p191 = pneg %p107
        %p192 = pneg %p104
        %s193 = sand.u32 %s94, 1
        %s194 = scalar_lea.sflag [#allocation4], %s193
        %s195 = sand.u32 %s94, 1
        %s196 = smul.addr %s195, 8
        %s197 = scalar_lea.vmem [#allocation7], %s196
        %s198 = smul.u32 2, %s24
        %s199 = smul.u32 2, %s24
        %v201 = vld [vmem:[#allocation2] sm:$0xf]
        %v202 = vld [vmem:[#allocation2 + $0x4] sm:$0xf]
        %v203 = vld [vmem:[%s177] sm:$0xf]
        %v204 = vld [vmem:[%s177 + $0x4] sm:$0xf]
        %v205 = vld [vmem:[%s177 + $0x8] sm:$0xf]
        %v206 = vld [vmem:[%s177 + $0xc] sm:$0xf]
        %v207 = vld [vmem:[%s177 + $0x10] sm:$0xf]
        %v208 = vld [vmem:[%s177 + $0x14] sm:$0xf]
        %v209 = vld [vmem:[%s177 + $0x18] sm:$0xf]
        %v210 = vld [vmem:[%s177 + $0x1c] sm:$0xf]
        %v211 = vld [vmem:[%s177 + $0x20] sm:$0xf]
        %v212 = vld [vmem:[%s177 + $0x24] sm:$0xf]
        %v213 = vld [vmem:[%s177 + $0x28] sm:$0xf]
        %v214 = vld [vmem:[%s177 + $0x2c] sm:$0xf]
        %v215 = vld [vmem:[%s177 + $0x30] sm:$0xf]
        %v216 = vld [vmem:[%s177 + $0x34] sm:$0xf]
        %v217 = vld [vmem:[%s177 + $0x38] sm:$0xf]
        %v218 = vld [vmem:[%s177 + $0x3c] sm:$0xf]
        %v221 = vunpack.c.l.b16 %v201
        %v222 = vunpack.c.l.b16 %v202
        %v223 = vpack.c.b16 %v222, %v221
        %v241 = vunpack.c.l.b16 %v203
        %v242 = vunpack.c.l.b16 %v204
        %v243 = vunpack.c.l.b16 %v205
        %v244 = vunpack.c.l.b16 %v206
        %v245 = vunpack.c.l.b16 %v207
        %v246 = vunpack.c.l.b16 %v208
        %v247 = vunpack.c.l.b16 %v209
        %v248 = vunpack.c.l.b16 %v210
        %v249 = vunpack.c.l.b16 %v211
        %v250 = vunpack.c.l.b16 %v212
        %v251 = vunpack.c.l.b16 %v213
        %v252 = vunpack.c.l.b16 %v214
        %v253 = vunpack.c.l.b16 %v215
        %v254 = vunpack.c.l.b16 %v216
        %v255 = vunpack.c.l.b16 %v217
        %v256 = vunpack.c.l.b16 %v218
        %v257 = vpack.c.b16 %v242, %v241
        %v258 = vpack.c.b16 %v244, %v243
        %v259 = vpack.c.b16 %v246, %v245
        %v260 = vpack.c.b16 %v248, %v247
        %v261 = vpack.c.b16 %v250, %v249
        %v262 = vpack.c.b16 %v252, %v251
        %v263 = vpack.c.b16 %v254, %v253
        %v264 = vpack.c.b16 %v256, %v255
        %273 = vmatprep.subr.bf16.mxu0 0
        %274 = vmatpush1.bf16.msra.mxu0 %v257
        %275 = vmatprep.subr.bf16.mxu0 0
        %276 = vmatpush1.bf16.msra.mxu0 %v258
        %277 = vmatprep.subr.bf16.mxu0 0
        %278 = vmatpush1.bf16.msra.mxu0 %v259
        %279 = vmatprep.subr.bf16.mxu0 0
        %280 = vmatpush1.bf16.msra.mxu0 %v260
        %281 = vmatprep.subr.bf16.mxu0 0
        %282 = vmatpush1.bf16.msra.mxu0 %v261
        %283 = vmatprep.subr.bf16.mxu0 0
        %284 = vmatpush1.bf16.msra.mxu0 %v262
        %285 = vmatprep.subr.bf16.mxu0 0
        %286 = vmatpush1.bf16.msra.mxu0 %v263
        %287 = vmatprep.subr.bf16.mxu0 0
        %288 = vmatpush1.bf16.msra.mxu0 %v264
        %289 = vmatprep.subr.bf16.mxu0 0
        %290 = vmatpush1.bf16.msra.mxu0 0
        %291 = vmatprep.subr.bf16.mxu0 0
        %292 = vmatpush1.bf16.msra.mxu0 0
        %293 = vmatprep.subr.bf16.mxu0 0
        %294 = vmatpush1.bf16.msra.mxu0 0
        %295 = vmatprep.subr.bf16.mxu0 0
        %296 = vmatpush1.bf16.msra.mxu0 0
        %297 = vmatprep.subr.bf16.mxu0 0
        %298 = vmatpush1.bf16.msra.mxu0 0
        %299 = vmatprep.subr.bf16.mxu0 0
        %300 = vmatpush1.bf16.msra.mxu0 0
        %301 = vmatprep.subr.bf16.mxu0 0
        %302 = vmatpush1.bf16.msra.mxu0 0
        %303 = vmatprep.subr.bf16.mxu0 0
        %304 = vmatpush1.bf16.msra.mxu0 0
        %305 = vmatprep.mubr.bf16.mxu0 0
        %306 = vmatmul.mubr.bf16.gmra.mrb[0].mxu0 %v223
        %v307 = vpop.f32.mrb[0].mxu0
        %v308 = vadd.f32 0.0, %v307
        %v309 = vpop.f32.mrb[0].mxu0
        %v310 = vpop.f32.mrb[0].mxu0
        %v311 = vadd.f32 0.0, %v310
        %v312 = vpop.f32.mrb[0].mxu0
        %313 = vdwg.mxu0
        %v314 = vpack.c.bf16 %v311, %v308
        %v316 = vunpack.c.l.b16 %v314
        %v317 = vunpack.c.h.b16 %v314
        %v318 = vpack.c.b16 %v316, %v316
        %v319 = vpack.c.b16 %v317, %v317
        %322 = vst [vmem:[%s197] sm:$0xf] %v318
        %323 = vst [vmem:[%s197 + $0x4] sm:$0xf] %v319
        %s324 = sand.u32 %s94, 1
        %s325 = scalar_lea.sflag [#allocation4], %s324
        %s326 = sand.u32 %s94, 1
        %s327 = smul.addr %s326, 8
        %s328 = scalar_lea.vmem [#allocation7], %s327
        // Predicated region
        $region37: #{tpu_custom_call.1} parent=27 // pred_check
          %p329 = pneg %p104
        $region38: #{tpu_custom_call.1} parent=27 // pred_check_branch
          %331 = sbr.rel (%p329) target = $region40
        $region39: #{tpu_custom_call.1} parent=27 // pred_region
          %s332 = smul.u32 2, %s24
          %s334 = ssub.s32 128, 128
          %335 = vsyncadd %s325, %s334
          %s336 = smul.addr %s332, 2
          %s337 = sadd.s32 %s25, %s336
          %s338 = smul.addr %s337, 64
          %s339 = scalar_lea.hbm %s2, %s338
          %s340 = sshll.u32 %s328, 4
          %s341 = int_to_ptr.vmem [resolvable:$true] %s340
          %346 = dma.vmem_to_hbm [thread:$0]  %s341, 128, %s339, %s325, 64, 128, 4
        $region40: #{tpu_custom_call.1} parent=27 // pred_fallthru
          _
      $region28: #{tpu_custom_call.1} parent=5 // pred_fallthru
        _
      %p347 = scmp.le.s32.totalorder 2, %s15
      // Predicated region
      $region41: #{tpu_custom_call.1} parent=5 // pred_check
        %p348 = pneg %p347
      $region42: #{tpu_custom_call.1} parent=5 // pred_check_branch
        %350 = sbr.rel (%p348) target = $region44
      $region43: #{tpu_custom_call.1} parent=5 // pred_region
        %s351 = ssub.s32 %s15, 2
        // Predicated region
        $region45: #{tpu_custom_call.1} parent=43 // pred_check
          %p352 = pneg %p110
        $region46: #{tpu_custom_call.1} parent=43 // pred_check_branch
          %354 = sbr.rel (%p352) target = $region48
        $region47: #{tpu_custom_call.1} parent=43 // pred_region
          %s355 = sand.u32 %s95, 1
          %s356 = scalar_lea.sflag [#allocation4], %s355
          %s357 = sand.u32 %s95, 1
          %s358 = smul.addr %s357, 8
          %s359 = scalar_lea.vmem [#allocation7], %s358
          %360 = dma.done %s356, 128
        $region48: #{tpu_custom_call.1} parent=43 // pred_fallthru
          _
      $region44: #{tpu_custom_call.1} parent=5 // pred_fallthru
        _
    $region6: #{tpu_custom_call.1} parent=1 // loop_footer
      %s19 = sadd.s32 1, %s15
    $region7: #{tpu_custom_call.1} parent=1 // loop_footer_branch
      %14 = sbr.rel target = $region3
    $region8: #{tpu_custom_call.1} parent=1 // loop_exit
      _
    %361 = vsyncpa [#allocation3], 1
    %s362 = scalar_lea.sflag [#allocation3], 1
    %363 = vsyncpa %s362, 1
    %364 = vsyncpa [#allocation6], 1
    %s365 = scalar_lea.sflag [#allocation6], 1
    %366 = vsyncpa %s365, 1
    %367 = vsyncpa [#allocation4], 1
    %s368 = scalar_lea.sflag [#allocation4], 1
    %369 = vsyncpa %s368, 1

</llo_original>
